<compile_context>
chip_gen: v6e
topology: v6e:2x2x1
jax: 0.10.0
libtpu: 0.0.40
codegen_flags: <defaults>
</compile_context>

<pallas_src>
import jax
import jax.numpy as jnp
from jax.experimental import pallas as pl
from jax.experimental.pallas import tpu as pltpu


def _round_up(x, m):
    return ((x + m - 1) // m) * m


def _cdiv(a, b):
    return -(-a // b)


def _has_bf16_vpu():
    # v6e / v7x have a bf16 VALU path; v5e and older do not.
    try:
        kind = jax.devices()[0].device_kind.lower()
    except Exception:
        return False
    return not any(v in kind for v in ("v2", "v3", "v4", "v5"))


# ----------------------------------------------------------------------------
# Fused DenseVAE forward kernel
# ----------------------------------------------------------------------------
def _make_densevae_kernel(meta, n_enc, n_dec, latent, bf16_epilogue):
    """meta[l] = (row_off, fan_in, out_cols, kind) for packed-weight layer l."""

    def kernel(x_ref, eps_ref, wcat_ref, bcat_ref, recon_ref, head_ref):
        def matmul(h_bf16, l):
            off, k, n, _ = meta[l]
            w = wcat_ref[off:off + k, 0:n]          # bf16 (k, n), static slice
            acc = jnp.dot(h_bf16, w, preferred_element_type=jnp.float32)
            b = bcat_ref[l:l + 1, 0:n]              # f32 (1, n), static slice
            return acc, b

        def dense_relu(h_bf16, l):
            acc, b = matmul(h_bf16, l)
            if bf16_epilogue:                       # bf16 VALU (v6e / v7x)
                y = acc.astype(jnp.bfloat16) + b.astype(jnp.bfloat16)
                return jnp.maximum(y, 0.0)
            y = jnp.maximum(acc + b, 0.0)           # f32 epilogue (v5e)
            return y.astype(jnp.bfloat16)

        def dense_f32(h_bf16, l):
            acc, b = matmul(h_bf16, l)
            return acc + b                          # f32

        li = 0
        h = x_ref[...].astype(jnp.bfloat16)
        for _ in range(n_enc):                      # encoder: Linear + ReLU
            h = dense_relu(h, li)
            li += 1

        # Fused mu|logvar head, output padded to a 128-lane slab (lane-dense
        # store; cols >= 2*latent are exactly zero by construction).
        head = dense_f32(h, li)
        li += 1
        head_ref[...] = head

        mu = head[:, 0:latent]
        logvar = head[:, latent:2 * latent]
        # TODO(synk): latent_sample() missing from source -> standard
        # reparameterization with externally supplied eps (no clamp, PyTorch parity).
        z = mu + jnp.exp(0.5 * logvar) * eps_ref[...]

        h = z.astype(jnp.bfloat16)                  # decoder: Linear(+ReLU), last no ReLU
        for _ in range(n_dec - 1):
            h = dense_relu(h, li)
            li += 1
        recon_ref[...] = jnp.cos(dense_f32(h, li))  # x_recon.cos()

    return kernel


# ----------------------------------------------------------------------------
# Wrapper: single pallas_call, batch-only grid, packed VMEM-resident weights
# ----------------------------------------------------------------------------
def densevae_forward(P, x, eps):
    N, D = x.shape
    latent, latpad = P["latent"], P["latpad"]
    wcat, bcat = P["wcat"], P["bcat"]

    # Balanced batch tiles: 1024-row cap, >=2 grid steps for N >= 256 (v7x
    # megacore occupancy), ragged padding bounded to <8 rows per step.
    cap = 1024
    n_steps = max(_cdiv(N, cap), 2 if N >= 256 else 1)
    TB = _round_up(_cdiv(N, n_steps), 8)
    Mp = n_steps * TB
    if Mp != N:
        x = jnp.pad(x, ((0, Mp - N), (0, 0)))
        eps = jnp.pad(eps, ((0, Mp - N), (0, 0)))

    kernel = _make_densevae_kernel(P["meta"], P["n_enc"], P["n_dec"], latent,
                                   bf16_epilogue=_has_bf16_vpu())

    recon, head = pl.pallas_call(
        kernel,
        grid=(n_steps,),
        in_specs=[
            pl.BlockSpec((TB, D), lambda i: (i, 0)),        # x
            pl.BlockSpec((TB, latent), lambda i: (i, 0)),   # eps
            pl.BlockSpec(wcat.shape, lambda i: (0, 0)),     # packed weights (bf16)
            pl.BlockSpec(bcat.shape, lambda i: (0, 0)),     # packed biases  (f32)
        ],
        out_specs=(
            pl.BlockSpec((TB, D), lambda i: (i, 0)),        # recon (lane-dense)
            pl.BlockSpec((TB, latpad), lambda i: (i, 0)),   # mu|logvar slab (lane-dense)
        ),
        out_shape=(
            jax.ShapeDtypeStruct((Mp, D), jnp.float32),
            jax.ShapeDtypeStruct((Mp, latpad), jnp.float32),
        ),
        compiler_params=pltpu.CompilerParams(
            dimension_semantics=("parallel",),
            vmem_limit_bytes=64 * 1024 * 1024),
    )(x, eps, wcat, bcat)

    return recon[:N], head[:N, 0:latent], head[:N, latent:2 * latent]


# ----------------------------------------------------------------------------
# Parameter init (PyTorch nn.Linear default init); weights pre-transposed,
# bf16-cast once, and packed into one array with 32-row-aligned segments.
# ----------------------------------------------------------------------------
def init_params(key, *, latent_dimension, hidden_neurons, input_size):
    latent = latent_dimension
    latpad = _round_up(2 * latent, 128)

    # (kind, fan_in, kernel_out_cols); head = fused mu|logvar padded to latpad.
    layers = []
    d_in = input_size
    for h in hidden_neurons:                                    # encoder
        layers.append(("relu", d_in, h))
        d_in = h
    layers.append(("head", hidden_neurons[-1], latpad))          # final_mu | latent_logvar
    dec_dims = [latent] + hidden_neurons[::-1] + [input_size]    # decoder
    for i in range(len(dec_dims) - 1):
        kind = "relu" if i < len(dec_dims) - 2 else "linear"
        layers.append((kind, dec_dims[i], dec_dims[i + 1]))

    n_layers = len(layers)
    lanes = _round_up(max(n for _, _, n in layers), 128)

    offs, off = [], 0                 # 32-row alignment -> bf16-sublane-safe static slices
    for _, k, _ in layers:
        offs.append(off)
        off += _round_up(k, 32)
    rows = _round_up(off, 32)

    wcat = jnp.zeros((rows, lanes), jnp.bfloat16)
    bcat = jnp.zeros((_round_up(n_layers, 8), lanes), jnp.float32)

    keys = iter(jax.random.split(key, 4 * n_layers))
    meta = []
    for l, (kind, fi, ncols) in enumerate(layers):
        bound = 1.0 / (fi ** 0.5)
        if kind == "head":
            # two independent nn.Linear(fi, latent) heads, fused column-wise
            w_mu = jax.random.uniform(next(keys), (fi, latent), jnp.float32, -bound, bound)
            b_mu = jax.random.uniform(next(keys), (latent,), jnp.float32, -bound, bound)
            w_lv = jax.random.uniform(next(keys), (fi, latent), jnp.float32, -bound, bound)
            b_lv = jax.random.uniform(next(keys), (latent,), jnp.float32, -bound, bound)
            w = jnp.concatenate([w_mu, w_lv], axis=1)            # (fi, 2*latent)
            b = jnp.concatenate([b_mu, b_lv])                    # (2*latent,)
            data_cols = 2 * latent
        else:
            w = jax.random.uniform(next(keys), (fi, ncols), jnp.float32, -bound, bound)
            b = jax.random.uniform(next(keys), (ncols,), jnp.float32, -bound, bound)
            data_cols = ncols
        wcat = wcat.at[offs[l]:offs[l] + fi, 0:data_cols].set(w.astype(jnp.bfloat16))
        bcat = bcat.at[l, 0:data_cols].set(b)
        meta.append((offs[l], fi, ncols, kind))

    return dict(latent=latent, latpad=latpad,
                n_enc=len(hidden_neurons),
                n_dec=len(hidden_neurons) + 1,
                meta=meta, wcat=wcat, bcat=bcat)


# ----------------------------------------------------------------------------
# Pure-JAX reference (same packed bf16 weights, f32 math) for a sanity check
# ----------------------------------------------------------------------------
def densevae_forward_ref(P, x, eps):
    meta = P["meta"]
    wcat = P["wcat"].astype(jnp.float32)
    bcat = P["bcat"]
    latent = P["latent"]

    def lin(h, l):
        off, k, n, _ = meta[l]
        return h @ wcat[off:off + k, 0:n] + bcat[l, 0:n]

    li = 0
    h = x
    for _ in range(P["n_enc"]):
        h = jnp.maximum(lin(h, li), 0.0)
        li += 1
    head = lin(h, li)
    li += 1
    mu = head[:, 0:latent]
    logvar = head[:, latent:2 * latent]
    z = mu + jnp.exp(0.5 * logvar) * eps
    h = z
    for j in range(P["n_dec"]):
        h = lin(h, li)
        li += 1
        if j < P["n_dec"] - 1:
            h = jnp.maximum(h, 0.0)
    return jnp.cos(h), mu, logvar


if __name__ == "__main__":
    batch = 8
    input_size = 256
    hidden_neurons = [128, 64]
    latent_dimension = 16

    key = jax.random.PRNGKey(0)
    pkey, xkey, ekey = jax.random.split(key, 3)
    P = init_params(pkey, latent_dimension=latent_dimension,
                    hidden_neurons=hidden_neurons, input_size=input_size)
    x = jax.random.normal(xkey, (batch, input_size), jnp.float32)
    eps = jax.random.normal(ekey, (batch, latent_dimension), jnp.float32)

    fwd = jax.jit(lambda xx, ee: densevae_forward(P, xx, ee))
    x_recon, mu, logvar = fwd(x, eps)
    jax.block_until_ready((x_recon, mu, logvar))

    assert x_recon.shape == (batch, input_size), x_recon.shape
    assert mu.shape == (batch, latent_dimension), mu.shape
    assert logvar.shape == (batch, latent_dimension), logvar.shape
    assert bool(jnp.all(jnp.isfinite(x_recon)))
    assert bool(jnp.all(jnp.isfinite(mu)))
    assert bool(jnp.all(jnp.isfinite(logvar)))

    r_recon, r_mu, r_logvar = densevae_forward_ref(P, x, eps)
    assert jnp.allclose(x_recon, r_recon, atol=5e-2, rtol=5e-2)
    assert jnp.allclose(mu, r_mu, atol=5e-2, rtol=5e-2)
    assert jnp.allclose(logvar, r_logvar, atol=5e-2, rtol=5e-2)

    print("KERNEL_OK")
</pallas_src>

<mosaic_0001>
module attributes {stable_mosaic.version = 11 : i64} {
  func.func @kernel(%arg0: i32, %arg1: memref<8x256xf32, #tpu.memory_space<vmem>>, %arg2: memref<8x16xf32, #tpu.memory_space<vmem>>, %arg3: memref<672x256xbf16, #tpu.memory_space<vmem>>, %arg4: memref<8x256xf32, #tpu.memory_space<vmem>>, %arg5: memref<8x256xf32, #tpu.memory_space<vmem>>, %arg6: memref<8x128xf32, #tpu.memory_space<vmem>>) attributes {dimension_semantics = [#tpu.dimension_semantics<parallel>], iteration_bounds = array<i64: 1>, scalar_prefetch = 0 : i64, scratch_operands = 0 : i64, tpu.core_type = #tpu.core_type<tc>, window_params = [{transform_indices = @transform_0, window_bounds = array<i64: 8, 256>}, {transform_indices = @transform_1, window_bounds = array<i64: 8, 16>}, {pipeline_mode = #tpu.pipeline_mode<synchronous>, transform_indices = @transform_2, window_bounds = array<i64: 672, 256>}, {pipeline_mode = #tpu.pipeline_mode<synchronous>, transform_indices = @transform_3, window_bounds = array<i64: 8, 256>}, {transform_indices = @transform_4, window_bounds = array<i64: 8, 256>}, {transform_indices = @transform_5, window_bounds = array<i64: 8, 128>}]} {
    %c0 = arith.constant 0 : index
    %c0_0 = arith.constant 0 : index
    %0 = vector.load %arg1[%c0, %c0_0] : memref<8x256xf32, #tpu.memory_space<vmem>>, vector<8x256xf32>
    %1 = arith.truncf %0 : vector<8x256xf32> to vector<8x256xbf16>
    %c0_1 = arith.constant 0 : index
    %c0_2 = arith.constant 0 : index
    %2 = vector.load %arg3[%c0_1, %c0_2] : memref<672x256xbf16, #tpu.memory_space<vmem>>, vector<256x128xbf16>
    %cst = arith.constant dense<0.000000e+00> : vector<8x128xf32>
    %3 = tpu.matmul %1, %2, %cst {dimension_numbers = #tpu.dot_dimension_numbers<[1], [0], [0], [1], [0, 0, 1, 1], [], []>} : vector<8x256xbf16>, vector<256x128xbf16>, vector<8x128xf32> -> vector<8x128xf32>
    %c0_3 = arith.constant 0 : index
    %c0_4 = arith.constant 0 : index
    %4 = vector.load %arg4[%c0_3, %c0_4] : memref<8x256xf32, #tpu.memory_space<vmem>>, vector<1x128xf32>
    %5 = arith.truncf %3 : vector<8x128xf32> to vector<8x128xbf16>
    %6 = arith.truncf %4 : vector<1x128xf32> to vector<1x128xbf16>
    %7 = vector.broadcast %6 : vector<1x128xbf16> to vector<8x128xbf16>
    %8 = arith.addf %5, %7 : vector<8x128xbf16>
    %cst_5 = arith.constant 0.000000e+00 : bf16
    %9 = vector.broadcast %cst_5 : bf16 to vector<8x128xbf16>
    %10 = arith.maximumf %8, %9 : vector<8x128xbf16>
    %c256 = arith.constant 256 : index
    %c0_6 = arith.constant 0 : index
    %11 = vector.load %arg3[%c256, %c0_6] : memref<672x256xbf16, #tpu.memory_space<vmem>>, vector<128x64xbf16>
    %cst_7 = arith.constant dense<0.000000e+00> : vector<8x64xf32>
    %12 = tpu.matmul %10, %11, %cst_7 {dimension_numbers = #tpu.dot_dimension_numbers<[1], [0], [0], [1], [0, 0, 1, 1], [], []>} : vector<8x128xbf16>, vector<128x64xbf16>, vector<8x64xf32> -> vector<8x64xf32>
    %c1 = arith.constant 1 : index
    %c0_8 = arith.constant 0 : index
    %13 = vector.load %arg4[%c1, %c0_8] : memref<8x256xf32, #tpu.memory_space<vmem>>, vector<1x64xf32>
    %14 = arith.truncf %12 : vector<8x64xf32> to vector<8x64xbf16>
    %15 = arith.truncf %13 : vector<1x64xf32> to vector<1x64xbf16>
    %16 = vector.broadcast %15 : vector<1x64xbf16> to vector<8x64xbf16>
    %17 = arith.addf %14, %16 : vector<8x64xbf16>
    %cst_9 = arith.constant 0.000000e+00 : bf16
    %18 = vector.broadcast %cst_9 : bf16 to vector<8x64xbf16>
    %19 = arith.maximumf %17, %18 : vector<8x64xbf16>
    %c384 = arith.constant 384 : index
    %c0_10 = arith.constant 0 : index
    %20 = vector.load %arg3[%c384, %c0_10] : memref<672x256xbf16, #tpu.memory_space<vmem>>, vector<64x128xbf16>
    %cst_11 = arith.constant dense<0.000000e+00> : vector<8x128xf32>
    %21 = tpu.matmul %19, %20, %cst_11 {dimension_numbers = #tpu.dot_dimension_numbers<[1], [0], [0], [1], [0, 0, 1, 1], [], []>} : vector<8x64xbf16>, vector<64x128xbf16>, vector<8x128xf32> -> vector<8x128xf32>
    %c2 = arith.constant 2 : index
    %c0_12 = arith.constant 0 : index
    %22 = vector.load %arg4[%c2, %c0_12] : memref<8x256xf32, #tpu.memory_space<vmem>>, vector<1x128xf32>
    %23 = vector.broadcast %22 : vector<1x128xf32> to vector<8x128xf32>
    %24 = arith.addf %21, %23 : vector<8x128xf32>
    %c0_13 = arith.constant 0 : index
    %c0_14 = arith.constant 0 : index
    %25 = vector.load %arg6[%c0_13, %c0_14] : memref<8x128xf32, #tpu.memory_space<vmem>>, vector<8x128xf32>
    tpu.vector_store %arg6[%c0_13, %c0_14], %24 {strides = array<i32>} : memref<8x128xf32, #tpu.memory_space<vmem>>, vector<8x128xf32>,
    %26 = vector.extract_strided_slice %24 {offsets = [0, 0], sizes = [8, 16], strides = [1, 1]} : vector<8x128xf32> to vector<8x16xf32>
    %27 = vector.extract_strided_slice %24 {offsets = [0, 16], sizes = [8, 16], strides = [1, 1]} : vector<8x128xf32> to vector<8x16xf32>
    %cst_15 = arith.constant 5.000000e-01 : f32
    %28 = vector.broadcast %cst_15 : f32 to vector<8x16xf32>
    %29 = arith.mulf %28, %27 : vector<8x16xf32>
    %30 = math.exp %29 : vector<8x16xf32>
    %c0_16 = arith.constant 0 : index
    %c0_17 = arith.constant 0 : index
    %31 = vector.load %arg2[%c0_16, %c0_17] : memref<8x16xf32, #tpu.memory_space<vmem>>, vector<8x16xf32>
    %32 = arith.mulf %30, %31 : vector<8x16xf32>
    %33 = arith.addf %26, %32 : vector<8x16xf32>
    %34 = arith.truncf %33 : vector<8x16xf32> to vector<8x16xbf16>
    %c448 = arith.constant 448 : index
    %c0_18 = arith.constant 0 : index
    %35 = vector.load %arg3[%c448, %c0_18] : memref<672x256xbf16, #tpu.memory_space<vmem>>, vector<16x64xbf16>
    %cst_19 = arith.constant dense<0.000000e+00> : vector<8x64xf32>
    %36 = tpu.matmul %34, %35, %cst_19 {dimension_numbers = #tpu.dot_dimension_numbers<[1], [0], [0], [1], [0, 0, 1, 1], [], []>} : vector<8x16xbf16>, vector<16x64xbf16>, vector<8x64xf32> -> vector<8x64xf32>
    %c3 = arith.constant 3 : index
    %c0_20 = arith.constant 0 : index
    %37 = vector.load %arg4[%c3, %c0_20] : memref<8x256xf32, #tpu.memory_space<vmem>>, vector<1x64xf32>
    %38 = arith.truncf %36 : vector<8x64xf32> to vector<8x64xbf16>
    %39 = arith.truncf %37 : vector<1x64xf32> to vector<1x64xbf16>
    %40 = vector.broadcast %39 : vector<1x64xbf16> to vector<8x64xbf16>
    %41 = arith.addf %38, %40 : vector<8x64xbf16>
    %cst_21 = arith.constant 0.000000e+00 : bf16
    %42 = vector.broadcast %cst_21 : bf16 to vector<8x64xbf16>
    %43 = arith.maximumf %41, %42 : vector<8x64xbf16>
    %c480 = arith.constant 480 : index
    %c0_22 = arith.constant 0 : index
    %44 = vector.load %arg3[%c480, %c0_22] : memref<672x256xbf16, #tpu.memory_space<vmem>>, vector<64x128xbf16>
    %cst_23 = arith.constant dense<0.000000e+00> : vector<8x128xf32>
    %45 = tpu.matmul %43, %44, %cst_23 {dimension_numbers = #tpu.dot_dimension_numbers<[1], [0], [0], [1], [0, 0, 1, 1], [], []>} : vector<8x64xbf16>, vector<64x128xbf16>, vector<8x128xf32> -> vector<8x128xf32>
    %c4 = arith.constant 4 : index
    %c0_24 = arith.constant 0 : index
    %46 = vector.load %arg4[%c4, %c0_24] : memref<8x256xf32, #tpu.memory_space<vmem>>, vector<1x128xf32>
    %47 = arith.truncf %45 : vector<8x128xf32> to vector<8x128xbf16>
    %48 = arith.truncf %46 : vector<1x128xf32> to vector<1x128xbf16>
    %49 = vector.broadcast %48 : vector<1x128xbf16> to vector<8x128xbf16>
    %50 = arith.addf %47, %49 : vector<8x128xbf16>
    %cst_25 = arith.constant 0.000000e+00 : bf16
    %51 = vector.broadcast %cst_25 : bf16 to vector<8x128xbf16>
    %52 = arith.maximumf %50, %51 : vector<8x128xbf16>
    %c544 = arith.constant 544 : index
    %c0_26 = arith.constant 0 : index
    %53 = vector.load %arg3[%c544, %c0_26] : memref<672x256xbf16, #tpu.memory_space<vmem>>, vector<128x256xbf16>
    %cst_27 = arith.constant dense<0.000000e+00> : vector<8x256xf32>
    %54 = tpu.matmul %52, %53, %cst_27 {dimension_numbers = #tpu.dot_dimension_numbers<[1], [0], [0], [1], [0, 0, 1, 1], [], []>} : vector<8x128xbf16>, vector<128x256xbf16>, vector<8x256xf32> -> vector<8x256xf32>
    %c5 = arith.constant 5 : index
    %c0_28 = arith.constant 0 : index
    %55 = vector.load %arg4[%c5, %c0_28] : memref<8x256xf32, #tpu.memory_space<vmem>>, vector<1x256xf32>
    %56 = vector.broadcast %55 : vector<1x256xf32> to vector<8x256xf32>
    %57 = arith.addf %54, %56 : vector<8x256xf32>
    %58 = math.cos %57 : vector<8x256xf32>
    %c0_29 = arith.constant 0 : index
    %c0_30 = arith.constant 0 : index
    %59 = vector.load %arg5[%c0_29, %c0_30] : memref<8x256xf32, #tpu.memory_space<vmem>>, vector<8x256xf32>
    tpu.vector_store %arg5[%c0_29, %c0_30], %58 {strides = array<i32>} : memref<8x256xf32, #tpu.memory_space<vmem>>, vector<8x256xf32>,
    return
  }
  func.func @transform_0(%arg0: i32) -> (i32, i32) {
    %c0_i32 = arith.constant 0 : i32
    %c0_i32_0 = arith.constant 0 : i32
    return %arg0, %c0_i32 : i32, i32
  }
  func.func @transform_1(%arg0: i32) -> (i32, i32) {
    %c0_i32 = arith.constant 0 : i32
    %c0_i32_0 = arith.constant 0 : i32
    return %arg0, %c0_i32 : i32, i32
  }
  func.func @transform_2(%arg0: i32) -> (i32, i32) {
    %c0_i32 = arith.constant 0 : i32
    %c0_i32_0 = arith.constant 0 : i32
    %c0_i32_1 = arith.constant 0 : i32
    return %c0_i32, %c0_i32_0 : i32, i32
  }
  func.func @transform_3(%arg0: i32) -> (i32, i32) {
    %c0_i32 = arith.constant 0 : i32
    %c0_i32_0 = arith.constant 0 : i32
    %c0_i32_1 = arith.constant 0 : i32
    return %c0_i32, %c0_i32_0 : i32, i32
  }
  func.func @transform_4(%arg0: i32) -> (i32, i32) {
    %c0_i32 = arith.constant 0 : i32
    %c0_i32_0 = arith.constant 0 : i32
    return %arg0, %c0_i32 : i32, i32
  }
  func.func @transform_5(%arg0: i32) -> (i32, i32) {
    %c0_i32 = arith.constant 0 : i32
    %c0_i32_0 = arith.constant 0 : i32
    return %arg0, %c0_i32 : i32, i32
  }
}

</mosaic_0001>

<llo_original>
// kernel: _lambda_.1
$region0: #{_lambda_.1}
  #allocation0 [shape = 'u32[]', space=smem, size = 0x4, offset = 0x4, fixed_abs, tag = 'smem constant byte address 0x4 - core index']
  #allocation1 [shape = 'u32[144,128]{1,0:T(1,128)}', space=vmem, size = 0x12000, scoped, tag = 'internal scratch']
  %s0 = inlined_call_operand.hbm [shape: f32[8,256], index: 0, kind: input, shape index: {}]
  %s1 = inlined_call_operand.hbm [shape: f32[8,16], index: 1, kind: input, shape index: {}]
  %s2 = inlined_call_operand.hbm [shape: bf16[672,256], index: 2, kind: input, shape index: {}]
  %s3 = inlined_call_operand.hbm [shape: f32[8,256], index: 3, kind: input, shape index: {}]
  %s4 = inlined_call_operand.hbm [shape: f32[8,256], index: 4, kind: output, shape index: {0}]
  %s5 = inlined_call_operand.vmem [shape: f32[8,128], index: 5, kind: output, shape index: {1}]
  %6 = xla_tuple %s4, %s5
  %s7 = sld [smem:[#allocation0]]
  $region50: #{_lambda_.1} parent=0
    _
  %s9 = ssub.s32 1, %s7
  %s10 = scalar_select 0, %s9, %s7
  $region1: #{_lambda_.1} parent=0
    #allocation2 [shape = 'u8[8192]{0}', space=vmem, size = 0x2000, scoped, tag = 'input window, operand 0, single buffered']
    #allocation3 [shape = 's32[1]{0}', space=sflag, size = 0x4, scoped, tag = 'scoped memory for _lambda_.1']
    #allocation4 [shape = 's32[1]{0}', space=sflag, size = 0x4, scoped, tag = 'scoped memory for _lambda_.1']
    #allocation5 [shape = 'u8[4096]{0}', space=vmem, size = 0x1000, scoped, tag = 'input window, operand 1, single buffered']
    #allocation6 [shape = 's32[1]{0}', space=sflag, size = 0x4, scoped, tag = 'scoped memory for _lambda_.1']
    #allocation7 [shape = 'u8[344064]{0}', space=vmem, size = 0x54000, scoped, tag = 'input window, operand 2, single buffered']
    #allocation8 [shape = 'u8[8192]{0}', space=vmem, size = 0x2000, scoped, tag = 'input window, operand 3, single buffered']
    #allocation9 [shape = 's32[1]{0}', space=sflag, size = 0x4, scoped, tag = 'scoped memory for _lambda_.1']
    #allocation10 [shape = 'u8[8192]{0}', space=vmem, size = 0x2000, scoped, tag = 'output window, operand 0, single buffered']
    %11 = vsyncpa [#allocation3], 0
    %12 = vsyncpa [#allocation6], 0
    %13 = vsyncpa [#allocation9], 0
    %14 = vsyncpa [#allocation4], 0
    // Predicated region
    $region2: #{_lambda_.1} parent=1 // pred_check
      _
    $region3: #{_lambda_.1} parent=1 // pred_check_branch
      %16 = sbr.rel (0) target = $region5
    $region4: #{_lambda_.1} parent=1 // pred_region
      %s18 = ssub.s32 256, 256
      %19 = vsyncadd [#allocation3], %s18
      %s21 = sshll.u32 [#allocation2], 4
      %s22 = int_to_ptr.vmem [resolvable:$true] %s21
      %24 = dma.hbm_to_vmem [thread:$0]  %s0, 256, %s22, [#allocation3]
    $region5: #{_lambda_.1} parent=1 // pred_fallthru
      _
    // Predicated region
    $region6: #{_lambda_.1} parent=1 // pred_check
      _
    $region7: #{_lambda_.1} parent=1 // pred_check_branch
      %26 = sbr.rel (0) target = $region9
    $region8: #{_lambda_.1} parent=1 // pred_region
      %s28 = ssub.s32 128, 128
      %29 = vsyncadd [#allocation6], %s28
      %s31 = sshll.u32 [#allocation5], 4
      %s32 = int_to_ptr.vmem [resolvable:$true] %s31
      %34 = dma.hbm_to_vmem [thread:$0]  %s1, 128, %s32, [#allocation6]
    $region9: #{_lambda_.1} parent=1 // pred_fallthru
      _
    // Predicated region
    $region10: #{_lambda_.1} parent=1 // pred_check
      _
    $region11: #{_lambda_.1} parent=1 // pred_check_branch
      %36 = sbr.rel (0) target = $region13
    $region12: #{_lambda_.1} parent=1 // pred_region
      %s38 = ssub.s32 10752, 10752
      %39 = vsyncadd [#allocation6], %s38
      %s40 = sshll.u32 [#allocation7], 4
      %s41 = int_to_ptr.vmem [resolvable:$true] %s40
      %46 = dma.hbm_to_vmem [thread:$0]  %s2, 10752, %s41, [#allocation6], 128, 128, 8
    $region13: #{_lambda_.1} parent=1 // pred_fallthru
      _
    // Predicated region
    $region14: #{_lambda_.1} parent=1 // pred_check
      _
    $region15: #{_lambda_.1} parent=1 // pred_check_branch
      %48 = sbr.rel (0) target = $region17
    $region16: #{_lambda_.1} parent=1 // pred_region
      %s50 = ssub.s32 256, 256
      %51 = vsyncadd [#allocation9], %s50
      %s53 = sshll.u32 [#allocation8], 4
      %s54 = int_to_ptr.vmem [resolvable:$true] %s53
      %56 = dma.hbm_to_vmem [thread:$0]  %s3, 256, %s54, [#allocation9]
    $region17: #{_lambda_.1} parent=1 // pred_fallthru
      _
    // Predicated region
    $region18: #{_lambda_.1} parent=1 // pred_check
      _
    $region19: #{_lambda_.1} parent=1 // pred_check_branch
      %58 = sbr.rel (0) target = $region21
    $region20: #{_lambda_.1} parent=1 // pred_region
      %59 = dma.done [#allocation3], 256
    $region21: #{_lambda_.1} parent=1 // pred_fallthru
      _
    // Predicated region
    $region22: #{_lambda_.1} parent=1 // pred_check
      _
    $region23: #{_lambda_.1} parent=1 // pred_check_branch
      %61 = sbr.rel (0) target = $region25
    $region24: #{_lambda_.1} parent=1 // pred_region
      %62 = dma.done [#allocation6], 128
    $region25: #{_lambda_.1} parent=1 // pred_fallthru
      _
    // Predicated region
    $region26: #{_lambda_.1} parent=1 // pred_check
      _
    $region27: #{_lambda_.1} parent=1 // pred_check_branch
      %64 = sbr.rel (0) target = $region29
    $region28: #{_lambda_.1} parent=1 // pred_region
      %65 = dma.done [#allocation6], 10752
    $region29: #{_lambda_.1} parent=1 // pred_fallthru
      _
    // Predicated region
    $region30: #{_lambda_.1} parent=1 // pred_check
      _
    $region31: #{_lambda_.1} parent=1 // pred_check_branch
      %67 = sbr.rel (0) target = $region33
    $region32: #{_lambda_.1} parent=1 // pred_region
      %68 = dma.done [#allocation9], 256
    $region33: #{_lambda_.1} parent=1 // pred_fallthru
      _
    %v70 = vld [vmem:[#allocation2] sm:$0xff]
    %v71 = vld [vmem:[#allocation2 + $0x8] sm:$0xff]
    %v72 = vpack.c.bf16 %v70, %v70
    %v73 = vpack.c.bf16 %v71, %v71
    %v74 = vld [vmem:[#allocation7] sm:$0xf]
    %v75 = vld [vmem:[#allocation7 + $0x8] sm:$0xf]
    %v76 = vld [vmem:[#allocation7 + $0x10] sm:$0xf]
    %v77 = vld [vmem:[#allocation7 + $0x18] sm:$0xf]
    %v78 = vld [vmem:[#allocation7 + $0x20] sm:$0xf]
    %v79 = vld [vmem:[#allocation7 + $0x28] sm:$0xf]
    %v80 = vld [vmem:[#allocation7 + $0x30] sm:$0xf]
    %v81 = vld [vmem:[#allocation7 + $0x38] sm:$0xf]
    %v82 = vld [vmem:[#allocation7 + $0x40] sm:$0xf]
    %v83 = vld [vmem:[#allocation7 + $0x48] sm:$0xf]
    %v84 = vld [vmem:[#allocation7 + $0x50] sm:$0xf]
    %v85 = vld [vmem:[#allocation7 + $0x58] sm:$0xf]
    %v86 = vld [vmem:[#allocation7 + $0x60] sm:$0xf]
    %v87 = vld [vmem:[#allocation7 + $0x68] sm:$0xf]
    %v88 = vld [vmem:[#allocation7 + $0x70] sm:$0xf]
    %v89 = vld [vmem:[#allocation7 + $0x78] sm:$0xf]
    %v90 = vld [vmem:[#allocation7 + $0x80] sm:$0xf]
    %v91 = vld [vmem:[#allocation7 + $0x88] sm:$0xf]
    %v92 = vld [vmem:[#allocation7 + $0x90] sm:$0xf]
    %v93 = vld [vmem:[#allocation7 + $0x98] sm:$0xf]
    %v94 = vld [vmem:[#allocation7 + $0xa0] sm:$0xf]
    %v95 = vld [vmem:[#allocation7 + $0xa8] sm:$0xf]
    %v96 = vld [vmem:[#allocation7 + $0xb0] sm:$0xf]
    %v97 = vld [vmem:[#allocation7 + $0xb8] sm:$0xf]
    %v98 = vld [vmem:[#allocation7 + $0xc0] sm:$0xf]
    %v99 = vld [vmem:[#allocation7 + $0xc8] sm:$0xf]
    %v100 = vld [vmem:[#allocation7 + $0xd0] sm:$0xf]
    %v101 = vld [vmem:[#allocation7 + $0xd8] sm:$0xf]
    %v102 = vld [vmem:[#allocation7 + $0xe0] sm:$0xf]
    %v103 = vld [vmem:[#allocation7 + $0xe8] sm:$0xf]
    %v104 = vld [vmem:[#allocation7 + $0xf0] sm:$0xf]
    %v105 = vld [vmem:[#allocation7 + $0xf8] sm:$0xf]
    %v138 = vunpack.c.l.b16 %v74
    %v139 = vunpack.c.l.b16 %v75
    %v140 = vunpack.c.l.b16 %v76
    %v141 = vunpack.c.l.b16 %v77
    %v142 = vunpack.c.l.b16 %v78
    %v143 = vunpack.c.l.b16 %v79
    %v144 = vunpack.c.l.b16 %v80
    %v145 = vunpack.c.l.b16 %v81
    %v146 = vunpack.c.l.b16 %v82
    %v147 = vunpack.c.l.b16 %v83
    %v148 = vunpack.c.l.b16 %v84
    %v149 = vunpack.c.l.b16 %v85
    %v150 = vunpack.c.l.b16 %v86
    %v151 = vunpack.c.l.b16 %v87
    %v152 = vunpack.c.l.b16 %v88
    %v153 = vunpack.c.l.b16 %v89
    %v154 = vunpack.c.l.b16 %v90
    %v155 = vunpack.c.l.b16 %v91
    %v156 = vunpack.c.l.b16 %v92
    %v157 = vunpack.c.l.b16 %v93
    %v158 = vunpack.c.l.b16 %v94
    %v159 = vunpack.c.l.b16 %v95
    %v160 = vunpack.c.l.b16 %v96
    %v161 = vunpack.c.l.b16 %v97
    %v162 = vunpack.c.l.b16 %v98
    %v163 = vunpack.c.l.b16 %v99
    %v164 = vunpack.c.l.b16 %v100
    %v165 = vunpack.c.l.b16 %v101
    %v166 = vunpack.c.l.b16 %v102
    %v167 = vunpack.c.l.b16 %v103
    %v168 = vunpack.c.l.b16 %v104
    %v169 = vunpack.c.l.b16 %v105
    %v170 = vpack.c.b16 %v139, %v138
    %v171 = vpack.c.b16 %v141, %v140
    %v172 = vpack.c.b16 %v143, %v142
    %v173 = vpack.c.b16 %v145, %v144
    %v174 = vpack.c.b16 %v147, %v146
    %v175 = vpack.c.b16 %v149, %v148
    %v176 = vpack.c.b16 %v151, %v150
    %v177 = vpack.c.b16 %v153, %v152
    %v178 = vpack.c.b16 %v155, %v154
    %v179 = vpack.c.b16 %v157, %v156
    %v180 = vpack.c.b16 %v159, %v158
    %v181 = vpack.c.b16 %v161, %v160
    %v182 = vpack.c.b16 %v163, %v162
    %v183 = vpack.c.b16 %v165, %v164
    %v184 = vpack.c.b16 %v167, %v166
    %v185 = vpack.c.b16 %v169, %v168
    %202 = vmatprep.subr.bf16.mxu0 0
    %203 = vmatpush1.bf16.msra.mxu0 %v177
    %204 = vmatprep.subr.bf16.mxu0 0
    %205 = vmatpush1.bf16.msra.mxu0 %v176
    %206 = vmatprep.subr.bf16.mxu0 0
    %207 = vmatpush1.bf16.msra.mxu0 %v175
    %208 = vmatprep.subr.bf16.mxu0 0
    %209 = vmatpush1.bf16.msra.mxu0 %v174
    %210 = vmatprep.subr.bf16.mxu0 0
    %211 = vmatpush1.bf16.msra.mxu0 %v173
    %212 = vmatprep.subr.bf16.mxu0 0
    %213 = vmatpush1.bf16.msra.mxu0 %v172
    %214 = vmatprep.subr.bf16.mxu0 0
    %215 = vmatpush1.bf16.msra.mxu0 %v171
    %216 = vmatprep.subr.bf16.mxu0 0
    %217 = vmatpush1.bf16.msra.mxu0 %v170
    %218 = vmatprep.subr.bf16.mxu0 0
    %219 = vmatpush2.bf16.msra.mxu0 %v185
    %220 = vmatprep.subr.bf16.mxu0 0
    %221 = vmatpush2.bf16.msra.mxu0 %v184
    %222 = vmatprep.subr.bf16.mxu0 0
    %223 = vmatpush2.bf16.msra.mxu0 %v183
    %224 = vmatprep.subr.bf16.mxu0 0
    %225 = vmatpush2.bf16.msra.mxu0 %v182
    %226 = vmatprep.subr.bf16.mxu0 0
    %227 = vmatpush2.bf16.msra.mxu0 %v181
    %228 = vmatprep.subr.bf16.mxu0 0
    %229 = vmatpush2.bf16.msra.mxu0 %v180
    %230 = vmatprep.subr.bf16.mxu0 0
    %231 = vmatpush2.bf16.msra.mxu0 %v179
    %232 = vmatprep.subr.bf16.mxu0 0
    %233 = vmatpush2.bf16.msra.mxu0 %v178
    %234 = vmatprep.mubr.bf16.mxu0 %v73
    %235 = vmatmul.mubr.bf16.gmra.mxu0 %v72
    %v236 = vpop.f32.mrf.mxu0
    %v237 = vadd.f32 0.0, %v236
    %v238 = vpop.f32.mrf.mxu0
    %v239 = vpop.f32.mrf.mxu0
    %v240 = vpop.f32.mrf.mxu0
    %241 = vdwg.mxu0
    %v242 = vld [vmem:[#allocation8] ss:$0 sm:$0xff]
    %v243 = vpack.c.bf16 %v237, %v237
    %v244 = vpack.c.bf16 %v242, %v242
    %v245 = vadd.bf16 %v243, %v244
    %v246 = vmax.bf16 %v245, 0
    %v247 = vld [vmem:[#allocation7 + $0x100] sm:$0xf]
    %v248 = vld [vmem:[#allocation7 + $0x108] sm:$0xf]
    %v249 = vld [vmem:[#allocation7 + $0x110] sm:$0xf]
    %v250 = vld [vmem:[#allocation7 + $0x118] sm:$0xf]
    %v251 = vld [vmem:[#allocation7 + $0x120] sm:$0xf]
    %v252 = vld [vmem:[#allocation7 + $0x128] sm:$0xf]
    %v253 = vld [vmem:[#allocation7 + $0x130] sm:$0xf]
    %v254 = vld [vmem:[#allocation7 + $0x138] sm:$0xf]
    %v255 = vld [vmem:[#allocation7 + $0x140] sm:$0xf]
    %v256 = vld [vmem:[#allocation7 + $0x148] sm:$0xf]
    %v257 = vld [vmem:[#allocation7 + $0x150] sm:$0xf]
    %v258 = vld [vmem:[#allocation7 + $0x158] sm:$0xf]
    %v259 = vld [vmem:[#allocation7 + $0x160] sm:$0xf]
    %v260 = vld [vmem:[#allocation7 + $0x168] sm:$0xf]
    %v261 = vld [vmem:[#allocation7 + $0x170] sm:$0xf]
    %v262 = vld [vmem:[#allocation7 + $0x178] sm:$0xf]
    %v279 = vunpack.c.l.b16 %v247
    %v280 = vunpack.c.l.b16 %v248
    %v281 = vunpack.c.l.b16 %v249
    %v282 = vunpack.c.l.b16 %v250
    %v283 = vunpack.c.l.b16 %v251
    %v284 = vunpack.c.l.b16 %v252
    %v285 = vunpack.c.l.b16 %v253
    %v286 = vunpack.c.l.b16 %v254
    %v287 = vunpack.c.l.b16 %v255
    %v288 = vunpack.c.l.b16 %v256
    %v289 = vunpack.c.l.b16 %v257
    %v290 = vunpack.c.l.b16 %v258
    %v291 = vunpack.c.l.b16 %v259
    %v292 = vunpack.c.l.b16 %v260
    %v293 = vunpack.c.l.b16 %v261
    %v294 = vunpack.c.l.b16 %v262
    %v295 = vpack.c.b16 %v280, %v279
    %v296 = vpack.c.b16 %v282, %v281
    %v297 = vpack.c.b16 %v284, %v283
    %v298 = vpack.c.b16 %v286, %v285
    %v299 = vpack.c.b16 %v288, %v287
    %v300 = vpack.c.b16 %v290, %v289
    %v301 = vpack.c.b16 %v292, %v291
    %v302 = vpack.c.b16 %v294, %v293
    %311 = vmatprep.subr.bf16.mxu0 0
    %312 = vmatpush1.bf16.msra.mxu0 %v302
    %313 = vmatprep.subr.bf16.mxu0 0
    %314 = vmatpush1.bf16.msra.mxu0 %v301
    %315 = vmatprep.subr.bf16.mxu0 0
    %316 = vmatpush1.bf16.msra.mxu0 %v300
    %317 = vmatprep.subr.bf16.mxu0 0
    %318 = vmatpush1.bf16.msra.mxu0 %v299
    %319 = vmatprep.subr.bf16.mxu0 0
    %320 = vmatpush1.bf16.msra.mxu0 %v298
    %321 = vmatprep.subr.bf16.mxu0 0
    %322 = vmatpush1.bf16.msra.mxu0 %v297
    %323 = vmatprep.subr.bf16.mxu0 0
    %324 = vmatpush1.bf16.msra.mxu0 %v296
    %325 = vmatprep.subr.bf16.mxu0 0
    %326 = vmatpush1.bf16.msra.mxu0 %v295
    %327 = vmatprep.subr.bf16.mxu0 0
    %328 = vmatpush2.bf16.msra.mxu0 0
    %329 = vmatprep.subr.bf16.mxu0 0
    %330 = vmatpush2.bf16.msra.mxu0 0
    %331 = vmatprep.subr.bf16.mxu0 0
    %332 = vmatpush2.bf16.msra.mxu0 0
    %333 = vmatprep.subr.bf16.mxu0 0
    %334 = vmatpush2.bf16.msra.mxu0 0
    %335 = vmatprep.subr.bf16.mxu0 0
    %336 = vmatpush2.bf16.msra.mxu0 0
    %337 = vmatprep.subr.bf16.mxu0 0
    %338 = vmatpush2.bf16.msra.mxu0 0
    %339 = vmatprep.subr.bf16.mxu0 0
    %340 = vmatpush2.bf16.msra.mxu0 0
    %341 = vmatprep.subr.bf16.mxu0 0
    %342 = vmatpush2.bf16.msra.mxu0 0
    %343 = vmatprep.mubr.bf16.mxu0 0
    %344 = vmatmul.mubr.bf16.gmra.mxu0 %v246
    %v345 = vpop.f32.mrf.mxu0
    %v346 = vadd.f32 0.0, %v345
    %v347 = vpop.f32.mrf.mxu0
    %v348 = vpop.f32.mrf.mxu0
    %v349 = vpop.f32.mrf.mxu0
    %350 = vdwg.mxu0
    %v351 = vld [vmem:[#allocation8 + $0x1] ss:$0 sm:$0xff]
    %v352 = vpack.c.bf16 %v346, %v346
    %v353 = vpack.c.bf16 %v351, %v351
    %v354 = vadd.bf16 %v352, %v353
    %v355 = vmax.bf16 %v354, 0
    %v356 = vld [vmem:[#allocation7 + $0x180] sm:$0xf]
    %v357 = vld [vmem:[#allocation7 + $0x188] sm:$0xf]
    %v358 = vld [vmem:[#allocation7 + $0x190] sm:$0xf]
    %v359 = vld [vmem:[#allocation7 + $0x198] sm:$0xf]
    %v360 = vld [vmem:[#allocation7 + $0x1a0] sm:$0xf]
    %v361 = vld [vmem:[#allocation7 + $0x1a8] sm:$0xf]
    %v362 = vld [vmem:[#allocation7 + $0x1b0] sm:$0xf]
    %v363 = vld [vmem:[#allocation7 + $0x1b8] sm:$0xf]
    %v364 = vld [vmem:[#allocation8 + $0x2] ss:$0 sm:$0xff]
    %v373 = vunpack.c.l.b16 %v356
    %v374 = vunpack.c.l.b16 %v357
    %v375 = vunpack.c.l.b16 %v358
    %v376 = vunpack.c.l.b16 %v359
    %v377 = vunpack.c.l.b16 %v360
    %v378 = vunpack.c.l.b16 %v361
    %v379 = vunpack.c.l.b16 %v362
    %v380 = vunpack.c.l.b16 %v363
    %v381 = vpack.c.b16 %v374, %v373
    %v382 = vpack.c.b16 %v376, %v375
    %v383 = vpack.c.b16 %v378, %v377
    %v384 = vpack.c.b16 %v380, %v379
    %vm389 = vcmask 523264
    %v391 = vsel %vm389, %v355, 0
    %393 = vmatprep.subr.bf16.mxu0 0
    %394 = vmatpush1.bf16.msra.mxu0 0
    %395 = vmatprep.subr.bf16.mxu0 0
    %396 = vmatpush1.bf16.msra.mxu0 0
    %397 = vmatprep.subr.bf16.mxu0 0
    %398 = vmatpush1.bf16.msra.mxu0 0
    %399 = vmatprep.subr.bf16.mxu0 0
    %400 = vmatpush1.bf16.msra.mxu0 0
    %401 = vmatprep.subr.bf16.mxu0 0
    %402 = vmatpush1.bf16.msra.mxu0 %v384
    %403 = vmatprep.subr.bf16.mxu0 0
    %404 = vmatpush1.bf16.msra.mxu0 %v383
    %405 = vmatprep.subr.bf16.mxu0 0
    %406 = vmatpush1.bf16.msra.mxu0 %v382
    %407 = vmatprep.subr.bf16.mxu0 0
    %408 = vmatpush1.bf16.msra.mxu0 %v381
    %409 = vmatprep.subr.bf16.mxu0 0
    %410 = vmatpush2.bf16.msra.mxu0 0
    %411 = vmatprep.subr.bf16.mxu0 0
    %412 = vmatpush2.bf16.msra.mxu0 0
    %413 = vmatprep.subr.bf16.mxu0 0
    %414 = vmatpush2.bf16.msra.mxu0 0
    %415 = vmatprep.subr.bf16.mxu0 0
    %416 = vmatpush2.bf16.msra.mxu0 0
    %417 = vmatprep.subr.bf16.mxu0 0
    %418 = vmatpush2.bf16.msra.mxu0 0
    %419 = vmatprep.subr.bf16.mxu0 0
    %420 = vmatpush2.bf16.msra.mxu0 0
    %421 = vmatprep.subr.bf16.mxu0 0
    %422 = vmatpush2.bf16.msra.mxu0 0
    %423 = vmatprep.subr.bf16.mxu0 0
    %424 = vmatpush2.bf16.msra.mxu0 0
    %425 = vmatprep.mubr.bf16.mxu0 0
    %426 = vmatmul.mubr.bf16.gmra.mxu0 %v391
    %v427 = vpop.f32.mrf.mxu0
    %v428 = vadd.f32 %v364, %v427
    %v429 = vpop.f32.mrf.mxu0
    %v430 = vpop.f32.mrf.mxu0
    %v431 = vpop.f32.mrf.mxu0
    %432 = vdwg.mxu0
    %433 = vst [vmem:[%s5] sm:$0xff] %v428
    %v434 = vmul.f32 %v428, 0.5
    %v435 = vmul.f32 %v434, 1.442695
    %v436 = vpow.pop %v435
    %v437 = vld [vmem:[#allocation5] sm:$0xff]
    %439 = vrot.lane.b32.xlu0 %v437, 16
    %v440 = vpop.permute.xlu0 %439
    %v442 = vmul.f32 %v436, %v440
    %444 = vrot.lane.b32.xlu0 %v442, 112
    %v445 = vpop.permute.xlu0 %444
    %v447 = vadd.f32 %v428, %v445
    %v448 = vpack.c.bf16 %v447, %v447
    %v449 = vld [vmem:[#allocation7 + $0x1c0] sm:$0xf]
    %v450 = vld [vmem:[#allocation7 + $0x1c8] sm:$0xf]
    %v453 = vunpack.c.l.b16 %v449
    %v454 = vunpack.c.l.b16 %v450
    %v455 = vpack.c.b16 %v454, %v453
    %vm457 = vcmask 130048
    %v459 = vsel %vm457, %v448, 0
    %461 = vmatprep.subr.bf16.mxu0 0
    %462 = vmatpush1.bf16.msra.mxu0 0
    %463 = vmatprep.subr.bf16.mxu0 0
    %464 = vmatpush1.bf16.msra.mxu0 0
    %465 = vmatprep.subr.bf16.mxu0 0
    %466 = vmatpush1.bf16.msra.mxu0 0
    %467 = vmatprep.subr.bf16.mxu0 0
    %468 = vmatpush1.bf16.msra.mxu0 0
    %469 = vmatprep.subr.bf16.mxu0 0
    %470 = vmatpush1.bf16.msra.mxu0 0
    %471 = vmatprep.subr.bf16.mxu0 0
    %472 = vmatpush1.bf16.msra.mxu0 0
    %473 = vmatprep.subr.bf16.mxu0 0
    %474 = vmatpush1.bf16.msra.mxu0 0
    %475 = vmatprep.subr.bf16.mxu0 0
    %476 = vmatpush1.bf16.msra.mxu0 %v455
    %477 = vmatprep.subr.bf16.mxu0 0
    %478 = vmatpush2.bf16.msra.mxu0 0
    %479 = vmatprep.subr.bf16.mxu0 0
    %480 = vmatpush2.bf16.msra.mxu0 0
    %481 = vmatprep.subr.bf16.mxu0 0
    %482 = vmatpush2.bf16.msra.mxu0 0
    %483 = vmatprep.subr.bf16.mxu0 0
    %484 = vmatpush2.bf16.msra.mxu0 0
    %485 = vmatprep.subr.bf16.mxu0 0
    %486 = vmatpush2.bf16.msra.mxu0 0
    %487 = vmatprep.subr.bf16.mxu0 0
    %488 = vmatpush2.bf16.msra.mxu0 0
    %489 = vmatprep.subr.bf16.mxu0 0
    %490 = vmatpush2.bf16.msra.mxu0 0
    %491 = vmatprep.subr.bf16.mxu0 0
    %492 = vmatpush2.bf16.msra.mxu0 0
    %493 = vmatprep.mubr.bf16.mxu0 0
    %494 = vmatmul.mubr.bf16.gmra.mxu0 %v459
    %v495 = vpop.f32.mrf.mxu0
    %v496 = vadd.f32 0.0, %v495
    %v497 = vpop.f32.mrf.mxu0
    %v498 = vpop.f32.mrf.mxu0
    %v499 = vpop.f32.mrf.mxu0
    %500 = vdwg.mxu0
    %v501 = vld [vmem:[#allocation8 + $0x3] ss:$0 sm:$0xff]
    %v502 = vpack.c.bf16 %v496, %v496
    %v503 = vpack.c.bf16 %v501, %v501
    %v504 = vadd.bf16 %v502, %v503
    %v505 = vmax.bf16 %v504, 0
    %v506 = vld [vmem:[#allocation7 + $0x1e0] sm:$0xf]
    %v507 = vld [vmem:[#allocation7 + $0x1e8] sm:$0xf]
    %v508 = vld [vmem:[#allocation7 + $0x1f0] sm:$0xf]
    %v509 = vld [vmem:[#allocation7 + $0x1f8] sm:$0xf]
    %v510 = vld [vmem:[#allocation7 + $0x200] sm:$0xf]
    %v511 = vld [vmem:[#allocation7 + $0x208] sm:$0xf]
    %v512 = vld [vmem:[#allocation7 + $0x210] sm:$0xf]
    %v513 = vld [vmem:[#allocation7 + $0x218] sm:$0xf]
    %v522 = vunpack.c.l.b16 %v506
    %v523 = vunpack.c.l.b16 %v507
    %v524 = vunpack.c.l.b16 %v508
    %v525 = vunpack.c.l.b16 %v509
    %v526 = vunpack.c.l.b16 %v510
    %v527 = vunpack.c.l.b16 %v511
    %v528 = vunpack.c.l.b16 %v512
    %v529 = vunpack.c.l.b16 %v513
    %v530 = vpack.c.b16 %v523, %v522
    %v531 = vpack.c.b16 %v525, %v524
    %v532 = vpack.c.b16 %v527, %v526
    %v533 = vpack.c.b16 %v529, %v528
    %v539 = vsel %vm389, %v505, 0
    %541 = vmatprep.subr.bf16.mxu0 0
    %542 = vmatpush1.bf16.msra.mxu0 0
    %543 = vmatprep.subr.bf16.mxu0 0
    %544 = vmatpush1.bf16.msra.mxu0 0
    %545 = vmatprep.subr.bf16.mxu0 0
    %546 = vmatpush1.bf16.msra.mxu0 0
    %547 = vmatprep.subr.bf16.mxu0 0
    %548 = vmatpush1.bf16.msra.mxu0 0
    %549 = vmatprep.subr.bf16.mxu0 0
    %550 = vmatpush1.bf16.msra.mxu0 %v533
    %551 = vmatprep.subr.bf16.mxu0 0
    %552 = vmatpush1.bf16.msra.mxu0 %v532
    %553 = vmatprep.subr.bf16.mxu0 0
    %554 = vmatpush1.bf16.msra.mxu0 %v531
    %555 = vmatprep.subr.bf16.mxu0 0
    %556 = vmatpush1.bf16.msra.mxu0 %v530
    %557 = vmatprep.subr.bf16.mxu0 0
    %558 = vmatpush2.bf16.msra.mxu0 0
    %559 = vmatprep.subr.bf16.mxu0 0
    %560 = vmatpush2.bf16.msra.mxu0 0
    %561 = vmatprep.subr.bf16.mxu0 0
    %562 = vmatpush2.bf16.msra.mxu0 0
    %563 = vmatprep.subr.bf16.mxu0 0
    %564 = vmatpush2.bf16.msra.mxu0 0
    %565 = vmatprep.subr.bf16.mxu0 0
    %566 = vmatpush2.bf16.msra.mxu0 0
    %567 = vmatprep.subr.bf16.mxu0 0
    %568 = vmatpush2.bf16.msra.mxu0 0
    %569 = vmatprep.subr.bf16.mxu0 0
    %570 = vmatpush2.bf16.msra.mxu0 0
    %571 = vmatprep.subr.bf16.mxu0 0
    %572 = vmatpush2.bf16.msra.mxu0 0
    %573 = vmatprep.mubr.bf16.mxu0 0
    %574 = vmatmul.mubr.bf16.gmra.mxu0 %v539
    %v575 = vpop.f32.mrf.mxu0
    %v576 = vadd.f32 0.0, %v575
    %v577 = vpop.f32.mrf.mxu0
    %v578 = vpop.f32.mrf.mxu0
    %v579 = vpop.f32.mrf.mxu0
    %580 = vdwg.mxu0
    %v581 = vld [vmem:[#allocation8 + $0x4] ss:$0 sm:$0xff]
    %v582 = vpack.c.bf16 %v576, %v576
    %v583 = vpack.c.bf16 %v581, %v581
    %v584 = vadd.bf16 %v582, %v583
    %v585 = vmax.bf16 %v584, 0
    %v586 = vld [vmem:[#allocation7 + $0x220] sm:$0xff]
    %v587 = vld [vmem:[#allocation7 + $0x228] sm:$0xff]
    %v588 = vld [vmem:[#allocation7 + $0x230] sm:$0xff]
    %v589 = vld [vmem:[#allocation7 + $0x238] sm:$0xff]
    %v590 = vld [vmem:[#allocation7 + $0x240] sm:$0xff]
    %v591 = vld [vmem:[#allocation7 + $0x248] sm:$0xff]
    %v592 = vld [vmem:[#allocation7 + $0x250] sm:$0xff]
    %v593 = vld [vmem:[#allocation7 + $0x258] sm:$0xff]
    %v594 = vld [vmem:[#allocation7 + $0x260] sm:$0xff]
    %v595 = vld [vmem:[#allocation7 + $0x268] sm:$0xff]
    %v596 = vld [vmem:[#allocation7 + $0x270] sm:$0xff]
    %v597 = vld [vmem:[#allocation7 + $0x278] sm:$0xff]
    %v598 = vld [vmem:[#allocation7 + $0x280] sm:$0xff]
    %v599 = vld [vmem:[#allocation7 + $0x288] sm:$0xff]
    %v600 = vld [vmem:[#allocation7 + $0x290] sm:$0xff]
    %v601 = vld [vmem:[#allocation7 + $0x298] sm:$0xff]
    %s602 = scalar_lea.vmem [#allocation8], 5
    %v603 = vld [vmem:[%s602] ss:$8 sm:$0x3]
    %v605 = vlaneseq
    %v606 = vshrl.u32 %v605, 7
    %v607 = vsub.s32 0, %v606
    %v608 = vrot.slane %v603, %v607
    %v609 = vlaneseq
    %v610 = vshrl.u32 %v609, 7
    %v611 = vsub.s32 1, %v610
    %v612 = vrot.slane %v603, %v611
    %v631 = vunpack.c.l.b16 %v586
    %v632 = vunpack.c.h.b16 %v586
    %v633 = vunpack.c.l.b16 %v587
    %v634 = vunpack.c.h.b16 %v587
    %v635 = vunpack.c.l.b16 %v588
    %v636 = vunpack.c.h.b16 %v588
    %v637 = vunpack.c.l.b16 %v589
    %v638 = vunpack.c.h.b16 %v589
    %v639 = vunpack.c.l.b16 %v590
    %v640 = vunpack.c.h.b16 %v590
    %v641 = vunpack.c.l.b16 %v591
    %v642 = vunpack.c.h.b16 %v591
    %v643 = vunpack.c.l.b16 %v592
    %v644 = vunpack.c.h.b16 %v592
    %v645 = vunpack.c.l.b16 %v593
    %v646 = vunpack.c.h.b16 %v593
    %v647 = vunpack.c.l.b16 %v594
    %v648 = vunpack.c.h.b16 %v594
    %v649 = vunpack.c.l.b16 %v595
    %v650 = vunpack.c.h.b16 %v595
    %v651 = vunpack.c.l.b16 %v596
    %v652 = vunpack.c.h.b16 %v596
    %v653 = vunpack.c.l.b16 %v597
    %v654 = vunpack.c.h.b16 %v597
    %v655 = vunpack.c.l.b16 %v598
    %v656 = vunpack.c.h.b16 %v598
    %v657 = vunpack.c.l.b16 %v599
    %v658 = vunpack.c.h.b16 %v599
    %v659 = vunpack.c.l.b16 %v600
    %v660 = vunpack.c.h.b16 %v600
    %v661 = vunpack.c.l.b16 %v601
    %v662 = vunpack.c.h.b16 %v601
    %v663 = vpack.c.b16 %v633, %v631
    %v664 = vpack.c.b16 %v634, %v632
    %v665 = vpack.c.b16 %v637, %v635
    %v666 = vpack.c.b16 %v638, %v636
    %v667 = vpack.c.b16 %v641, %v639
    %v668 = vpack.c.b16 %v642, %v640
    %v669 = vpack.c.b16 %v645, %v643
    %v670 = vpack.c.b16 %v646, %v644
    %v671 = vpack.c.b16 %v649, %v647
    %v672 = vpack.c.b16 %v650, %v648
    %v673 = vpack.c.b16 %v653, %v651
    %v674 = vpack.c.b16 %v654, %v652
    %v675 = vpack.c.b16 %v657, %v655
    %v676 = vpack.c.b16 %v658, %v656
    %v677 = vpack.c.b16 %v661, %v659
    %v678 = vpack.c.b16 %v662, %v660
    %695 = vmatprep.subr.bf16.mxu0 %v678
    %696 = vmatpush1.bf16.msra.mxu0 %v677
    %697 = vmatprep.subr.bf16.mxu0 %v676
    %698 = vmatpush1.bf16.msra.mxu0 %v675
    %699 = vmatprep.subr.bf16.mxu0 %v674
    %700 = vmatpush1.bf16.msra.mxu0 %v673
    %701 = vmatprep.subr.bf16.mxu0 %v672
    %702 = vmatpush1.bf16.msra.mxu0 %v671
    %703 = vmatprep.subr.bf16.mxu0 %v670
    %704 = vmatpush1.bf16.msra.mxu0 %v669
    %705 = vmatprep.subr.bf16.mxu0 %v668
    %706 = vmatpush1.bf16.msra.mxu0 %v667
    %707 = vmatprep.subr.bf16.mxu0 %v666
    %708 = vmatpush1.bf16.msra.mxu0 %v665
    %709 = vmatprep.subr.bf16.mxu0 %v664
    %710 = vmatpush1.bf16.msra.mxu0 %v663
    %711 = vmatprep.subr.bf16.mxu0 0
    %712 = vmatpush2.bf16.msra.mxu0 0
    %713 = vmatprep.subr.bf16.mxu0 0
    %714 = vmatpush2.bf16.msra.mxu0 0
    %715 = vmatprep.subr.bf16.mxu0 0
    %716 = vmatpush2.bf16.msra.mxu0 0
    %717 = vmatprep.subr.bf16.mxu0 0
    %718 = vmatpush2.bf16.msra.mxu0 0
    %719 = vmatprep.subr.bf16.mxu0 0
    %720 = vmatpush2.bf16.msra.mxu0 0
    %721 = vmatprep.subr.bf16.mxu0 0
    %722 = vmatpush2.bf16.msra.mxu0 0
    %723 = vmatprep.subr.bf16.mxu0 0
    %724 = vmatpush2.bf16.msra.mxu0 0
    %725 = vmatprep.subr.bf16.mxu0 0
    %726 = vmatpush2.bf16.msra.mxu0 0
    %727 = vmatprep.mubr.bf16.mxu0 0
    %728 = vmatmul.mubr.bf16.gmra.mxu0 %v585
    %v729 = vpop.f32.mrf.mxu0
    %v730 = vadd.f32 %v608, %v729
    %v731 = vpop.f32.mrf.mxu0
    %v732 = vadd.f32 %v612, %v731
    %v733 = vpop.f32.mrf.mxu0
    %v734 = vpop.f32.mrf.mxu0
    %735 = vdwg.mxu0
    %v736 = vand.u32 2147483647, %v730
    %vm737 = vcmp.le.f32.partialorder %v736, 0.7853982
    %vm738 = vcmp.lt.s32.totalorder %v730, 0
    %v739 = vand.u32 %v730, 2139095040
    %v740 = vshrl.u32 %v739, 23
    %v741 = vsub.s32 %v740, 127
    %v742 = vand.u32 2147483647, %v730
    %v743 = vand.u32 %v742, 8388607
    %v744 = vor.u32 %v743, 8388608
    %v745 = vsub.s32 0, %v744
    %v746 = vadd.s32 %v741, 1
    %vm747 = vcmp.gt.s32.totalorder %v746, 0
    %v748 = vsel %vm747, %v746, 0
    %v749 = vshrl.u32 %v748, 5
    %v750 = vand.u32 %v748, 31
    %v751 = vsub.s32 32, %v750
    %v752 = vshrl.u32 683565275, %v751
    %v753 = vshll.u32 683565275, %v750
    %v754 = vshrl.u32 2475754826, %v751
    %v755 = vor.u32 %v753, %v754
    %v756 = vshll.u32 2475754826, %v750
    %v757 = vshrl.u32 2131351028, %v751
    %v758 = vor.u32 %v756, %v757
    %v759 = vshll.u32 2131351028, %v750
    %v760 = vshrl.u32 2102212464, %v751
    %v761 = vor.u32 %v759, %v760
    %v762 = vshll.u32 2102212464, %v750
    %v763 = vshrl.u32 920167782, %v751
    %v764 = vor.u32 %v762, %v763
    %v765 = vshll.u32 920167782, %v750
    %v766 = vshrl.u32 1326507024, %v751
    %v767 = vor.u32 %v765, %v766
    %vm768 = vcmp.lt.s32.totalorder %v749, 1
    %vm769 = vcmp.lt.s32.totalorder %v749, 2
    %vm770 = vcmp.lt.s32.totalorder %v749, 3
    %vm771 = vcmp.lt.s32.totalorder %v749, 4
    %v772 = vsel %vm768, %v752, %v755
    %v773 = vsel %vm771, %v761, 2102212464
    %v774 = vsel %vm770, %v758, %v773
    %v775 = vsel %vm769, %v772, %v774
    %v776 = vsel %vm768, %v755, %v758
    %v777 = vsel %vm771, %v764, 920167782
    %v778 = vsel %vm770, %v761, %v777
    %v779 = vsel %vm769, %v776, %v778
    %v780 = vsel %vm768, %v758, %v761
    %v781 = vsel %vm771, %v767, 1326507024
    %v782 = vsel %vm770, %v764, %v781
    %v783 = vsel %vm769, %v780, %v782
    %v784 = vshll.u32 %v744, 8
    %v785 = vmul.u32.u64.compose %v784, %v783
    %v786 = vextract.low.u32 %v785
    %v787 = vextract.high.u32 %v785
    %v788 = vmul.u32.u64.compose %v784, %v779
    %v789 = vextract.low.u32 %v788
    %v790 = vextract.high.u32 %v788
    %v791 = vmul.u32 %v784, %v775
    %v792 = vadd.s32 %v787, %v789
    %vm793 = vc.u32 %v787, %v789
    %v794 = vadd.s32 %v790, 1
    %v795 = vsel %vm793, %v794, %v790
    %v796 = vadd.s32 %v791, %v795
    %v797 = vadd.s32 %v796, 536870912
    %v798 = vshrl.u32 %v797, 30
    %v799 = vshll.u32 %v798, 30
    %v800 = vsub.s32 %v796, %v799
    %vm801 = vcmp.lt.s32.totalorder %v800, 0
    %v802 = vsub.s32 0, %v800
    %v803 = vsel %vm801, %v802, %v800
    %v804 = vclz %v803
    %v805 = vsub.s32 %v804, 2
    %vm806 = vcmp.gt.s32.totalorder 0, %v805
    %v807 = vsel %vm806, 0, %v805
    %v808 = vsub.s32 32, %v807
    %v809 = vshll.u32 %v800, %v807
    %v810 = vshrl.u32 %v792, %v808
    %v811 = vor.u32 %v809, %v810
    %v812 = vsub.s32 4294967266, %v807
    %v813 = vadd.s32 %v812, 127
    %v814 = vshll.u32 %v813, 23
    %v815 = vor.u32 4788187, %v814
    %v816 = vand.u32 2147483647, %v815
    %v818 = vcvt.s32.f32 %v811
    %v819 = vmul.f32 %v818, %v816
    %v820 = vxor.u32 %v819, 2147483648
    %v821 = vsel %vm738, %v820, %v819
    %v822 = vsub.s32 4, %v798
    %v823 = vsel %vm738, %v822, %v798
    %v824 = vsel %vm737, %v730, %v821
    %v825 = vsel %vm737, 0, %v823
    %v826 = vcosq.f32.pop %v824
    %v827 = vsinq.f32.pop %v824
    %vm828 = vweird.f32 %v730
    %v829 = vand.u32 %v825, 3
    %vm830 = vcmp.lt.s32.totalorder %v829, 2
    %vm831 = vcmp.eq.s32.totalorder %v829, 0
    %v832 = vxor.u32 %v827, 2147483648
    %v833 = vsel %vm831, %v826, %v832
    %vm834 = vcmp.eq.s32.totalorder %v829, 2
    %v835 = vxor.u32 %v826, 2147483648
    %v836 = vsel %vm834, %v835, %v827
    %v837 = vsel %vm830, %v833, %v836
    %v838 = vsel %vm828, nan, %v837
    %v839 = vand.u32 2147483647, %v732
    %vm840 = vcmp.le.f32.partialorder %v839, 0.7853982
    %vm841 = vcmp.lt.s32.totalorder %v732, 0
    %v842 = vand.u32 %v732, 2139095040
    %v843 = vshrl.u32 %v842, 23
    %v844 = vsub.s32 %v843, 127
    %v845 = vand.u32 2147483647, %v732
    %v846 = vand.u32 %v845, 8388607
    %v847 = vor.u32 %v846, 8388608
    %v848 = vsub.s32 0, %v847
    %v849 = vadd.s32 %v844, 1
    %vm850 = vcmp.gt.s32.totalorder %v849, 0
    %v851 = vsel %vm850, %v849, 0
    %v852 = vshrl.u32 %v851, 5
    %v853 = vand.u32 %v851, 31
    %v854 = vsub.s32 32, %v853
    %v855 = vshrl.u32 683565275, %v854
    %v856 = vshll.u32 683565275, %v853
    %v857 = vshrl.u32 2475754826, %v854
    %v858 = vor.u32 %v856, %v857
    %v859 = vshll.u32 2475754826, %v853
    %v860 = vshrl.u32 2131351028, %v854
    %v861 = vor.u32 %v859, %v860
    %v862 = vshll.u32 2131351028, %v853
    %v863 = vshrl.u32 2102212464, %v854
    %v864 = vor.u32 %v862, %v863
    %v865 = vshll.u32 2102212464, %v853
    %v866 = vshrl.u32 920167782, %v854
    %v867 = vor.u32 %v865, %v866
    %v868 = vshll.u32 920167782, %v853
    %v869 = vshrl.u32 1326507024, %v854
    %v870 = vor.u32 %v868, %v869
    %vm871 = vcmp.lt.s32.totalorder %v852, 1
    %vm872 = vcmp.lt.s32.totalorder %v852, 2
    %vm873 = vcmp.lt.s32.totalorder %v852, 3
    %vm874 = vcmp.lt.s32.totalorder %v852, 4
    %v875 = vsel %vm871, %v855, %v858
    %v876 = vsel %vm874, %v864, 2102212464
    %v877 = vsel %vm873, %v861, %v876
    %v878 = vsel %vm872, %v875, %v877
    %v879 = vsel %vm871, %v858, %v861
    %v880 = vsel %vm874, %v867, 920167782
    %v881 = vsel %vm873, %v864, %v880
    %v882 = vsel %vm872, %v879, %v881
    %v883 = vsel %vm871, %v861, %v864
    %v884 = vsel %vm874, %v870, 1326507024
    %v885 = vsel %vm873, %v867, %v884
    %v886 = vsel %vm872, %v883, %v885
    %v887 = vshll.u32 %v847, 8
    %v888 = vmul.u32.u64.compose %v887, %v886
    %v889 = vextract.low.u32 %v888
    %v890 = vextract.high.u32 %v888
    %v891 = vmul.u32.u64.compose %v887, %v882
    %v892 = vextract.low.u32 %v891
    %v893 = vextract.high.u32 %v891
    %v894 = vmul.u32 %v887, %v878
    %v895 = vadd.s32 %v890, %v892
    %vm896 = vc.u32 %v890, %v892
    %v897 = vadd.s32 %v893, 1
    %v898 = vsel %vm896, %v897, %v893
    %v899 = vadd.s32 %v894, %v898
    %v900 = vadd.s32 %v899, 536870912
    %v901 = vshrl.u32 %v900, 30
    %v902 = vshll.u32 %v901, 30
    %v903 = vsub.s32 %v899, %v902
    %vm904 = vcmp.lt.s32.totalorder %v903, 0
    %v905 = vsub.s32 0, %v903
    %v906 = vsel %vm904, %v905, %v903
    %v907 = vclz %v906
    %v908 = vsub.s32 %v907, 2
    %vm909 = vcmp.gt.s32.totalorder 0, %v908
    %v910 = vsel %vm909, 0, %v908
    %v911 = vsub.s32 32, %v910
    %v912 = vshll.u32 %v903, %v910
    %v913 = vshrl.u32 %v895, %v911
    %v914 = vor.u32 %v912, %v913
    %v915 = vsub.s32 4294967266, %v910
    %v916 = vadd.s32 %v915, 127
    %v917 = vshll.u32 %v916, 23
    %v918 = vor.u32 4788187, %v917
    %v919 = vand.u32 2147483647, %v918
    %v921 = vcvt.s32.f32 %v914
    %v922 = vmul.f32 %v921, %v919
    %v923 = vxor.u32 %v922, 2147483648
    %v924 = vsel %vm841, %v923, %v922
    %v925 = vsub.s32 4, %v901
    %v926 = vsel %vm841, %v925, %v901
    %v927 = vsel %vm840, %v732, %v924
    %v928 = vsel %vm840, 0, %v926
    %v929 = vcosq.f32.pop %v927
    %v930 = vsinq.f32.pop %v927
    %vm931 = vweird.f32 %v732
    %v932 = vand.u32 %v928, 3
    %vm933 = vcmp.lt.s32.totalorder %v932, 2
    %vm934 = vcmp.eq.s32.totalorder %v932, 0
    %v935 = vxor.u32 %v930, 2147483648
    %v936 = vsel %vm934, %v929, %v935
    %vm937 = vcmp.eq.s32.totalorder %v932, 2
    %v938 = vxor.u32 %v929, 2147483648
    %v939 = vsel %vm937, %v938, %v930
    %v940 = vsel %vm933, %v936, %v939
    %v941 = vsel %vm931, nan, %v940
    %942 = vst [vmem:[#allocation10] sm:$0xff] %v838
    %943 = vst [vmem:[#allocation10 + $0x8] sm:$0xff] %v941
    // Predicated region
    $region34: #{_lambda_.1} parent=1 // pred_check
      _
    $region35: #{_lambda_.1} parent=1 // pred_check_branch
      %945 = sbr.rel (0) target = $region37
    $region36: #{_lambda_.1} parent=1 // pred_region
      %s947 = ssub.s32 256, 256
      %948 = vsyncadd [#allocation4], %s947
      %s950 = sshll.u32 [#allocation10], 4
      %s951 = int_to_ptr.vmem [resolvable:$true] %s950
      %953 = dma.vmem_to_hbm [thread:$0]  %s951, 256, %s4, [#allocation4]
    $region37: #{_lambda_.1} parent=1 // pred_fallthru
      _
    // Predicated region
    $region38: #{_lambda_.1} parent=1 // pred_check
      _
    $region39: #{_lambda_.1} parent=1 // pred_check_branch
      %955 = sbr.rel (0) target = $region41
    $region40: #{_lambda_.1} parent=1 // pred_region
      _
    $region41: #{_lambda_.1} parent=1 // pred_fallthru
      _
    // Predicated region
    $region42: #{_lambda_.1} parent=1 // pred_check
      _
    $region43: #{_lambda_.1} parent=1 // pred_check_branch
      %957 = sbr.rel (0) target = $region45
    $region44: #{_lambda_.1} parent=1 // pred_region
      %958 = dma.done [#allocation4], 256
    $region45: #{_lambda_.1} parent=1 // pred_fallthru
      _
    // Predicated region
    $region46: #{_lambda_.1} parent=1 // pred_check
      _
    $region47: #{_lambda_.1} parent=1 // pred_check_branch
      %960 = sbr.rel (0) target = $region49
    $region48: #{_lambda_.1} parent=1 // pred_region
      _
    $region49: #{_lambda_.1} parent=1 // pred_fallthru
      _
    %961 = vsyncpa [#allocation3], 1
    %962 = vsyncpa [#allocation6], 1
    %963 = vsyncpa [#allocation9], 1
    %964 = vsyncpa [#allocation4], 1

</llo_original>
